<compile_context>
chip_gen: v6e
topology: v6e:2x2x1
jax: 0.10.0
libtpu: 0.0.40
codegen_flags: <defaults>
</compile_context>

<pallas_src>
import functools

import jax
import jax.numpy as jnp
from jax import lax
from jax.experimental import pallas as pl
from jax.experimental.pallas import tpu as pltpu

LANE = 128                      # output feature dim padded to this (lane-dense stores)
SEQ_TILE = 256                  # flash-path sequence tile (use 128 on v5e)
FAST_PATH_MAX_S = 256           # single-block path for short sequences
VMEM_LIMIT_BYTES = 48 * 1024 * 1024   # > v5e 16MiB scoped default, headroom on v7x 64MiB


def _round_up(n, m):
    return ((n + m - 1) // m) * m


# ----------------------------------------------------------------------------
# Fast path: everything in one VMEM tile (no grid, no online softmax).
# ----------------------------------------------------------------------------
def _single_tile_kernel(x_ref, wq_ref, wk_ref, wv_ref, o_ref):
    x = x_ref[...]                                                   # (S, d_in) bf16
    # Wq is pre-scaled by 1/sqrt(d_out) in the wrapper.
    q = jnp.dot(x, wq_ref[...], preferred_element_type=jnp.float32)
    k = jnp.dot(x, wk_ref[...], preferred_element_type=jnp.float32)
    v = jnp.dot(x, wv_ref[...], preferred_element_type=jnp.float32)

    # Scores: contract the feature dims directly (no in-kernel transpose).
    s = lax.dot_general(q.astype(jnp.bfloat16), k.astype(jnp.bfloat16),
                        dimension_numbers=(((1,), (1,)), ((), ())),
                        preferred_element_type=jnp.float32)          # (S, S)
    m = jnp.max(s, axis=-1, keepdims=True)
    p = jnp.exp(s - m)
    l = jnp.sum(p, axis=-1, keepdims=True)
    p = p * pl.reciprocal(l, approx=True)
    o_ref[...] = jnp.dot(p.astype(jnp.bfloat16), v.astype(jnp.bfloat16),
                         preferred_element_type=jnp.float32).astype(o_ref.dtype)


# ----------------------------------------------------------------------------
# Flash path, pass 1: Q/K/V projection prologue (hoisted out of the kv loop).
# ----------------------------------------------------------------------------
def _qkv_proj_kernel(x_ref, wq_ref, wk_ref, wv_ref, q_ref, k_ref, v_ref):
    x = x_ref[...]                                                   # (T, d_in) bf16
    q_ref[...] = jnp.dot(x, wq_ref[...],
                         preferred_element_type=jnp.float32).astype(q_ref.dtype)
    k_ref[...] = jnp.dot(x, wk_ref[...],
                         preferred_element_type=jnp.float32).astype(k_ref.dtype)
    v_ref[...] = jnp.dot(x, wv_ref[...],
                         preferred_element_type=jnp.float32).astype(v_ref.dtype)


# ----------------------------------------------------------------------------
# Flash path, pass 2: online-softmax attention over precomputed Q/K/V tiles.
# ----------------------------------------------------------------------------
def _flash_attn_kernel(s_len, t_kv, needs_mask,
                       q_ref, k_ref, v_ref, o_ref, m_sc, l_sc, acc_sc):
    ki = pl.program_id(1)

    @pl.when(ki == 0)
    def _():
        m_sc[...] = jnp.full_like(m_sc, -jnp.inf)
        l_sc[...] = jnp.zeros_like(l_sc)
        acc_sc[...] = jnp.zeros_like(acc_sc)

    # (TQ, TK) scores; Q already carries the 1/sqrt(d_out) scale.
    s = lax.dot_general(q_ref[...], k_ref[...],
                        dimension_numbers=(((1,), (1,)), ((), ())),
                        preferred_element_type=jnp.float32)

    if needs_mask:   # static: only when the sequence was padded up to the tile size
        kv_pos = ki * t_kv + lax.broadcasted_iota(jnp.int32, s.shape, 1)
        s = jnp.where(kv_pos < s_len, s, -1e30)

    m_prev = m_sc[...]
    m_new = jnp.maximum(m_prev, jnp.max(s, axis=-1, keepdims=True))
    alpha = jnp.exp(m_prev - m_new)
    p = jnp.exp(s - m_new)
    l_sc[...] = alpha * l_sc[...] + jnp.sum(p, axis=-1, keepdims=True)
    acc_sc[...] = alpha * acc_sc[...] + jnp.dot(
        p.astype(jnp.bfloat16), v_ref[...], preferred_element_type=jnp.float32)
    m_sc[...] = m_new

    @pl.when(ki == pl.num_programs(1) - 1)
    def _():
        inv_l = pl.reciprocal(l_sc[...], approx=True)
        o_ref[...] = (acc_sc[...] * inv_l).astype(o_ref.dtype)


# ----------------------------------------------------------------------------
# Wrapper
# ----------------------------------------------------------------------------
def self_attention_same_weight(x, w_q, w_k, w_v, *, seq_tile=SEQ_TILE):
    """x: (S, d_in) f32; w_*: (d_in, d_out) f32 (module stores Linear weight.T)."""
    S, d_in = x.shape
    d_out = w_q.shape[-1]
    d_pad = _round_up(d_out, LANE)   # lane-dense output features

    scale = 1.0 / jnp.sqrt(jnp.float32(d_out))

    def prep(w, s=None):
        w = jnp.asarray(w, jnp.float32)
        if s is not None:
            w = w * s                                   # fold score scale into Wq
        if d_pad != d_out:
            w = jnp.pad(w, ((0, 0), (0, d_pad - d_out)))  # zero-pad output features
        return w.astype(jnp.bfloat16)

    wq = prep(w_q, scale)
    wk = prep(w_k)
    wv = prep(w_v)
    x_bf = jnp.asarray(x, jnp.float32).astype(jnp.bfloat16)

    # ---- fast path: single VMEM block, no grid ----
    if S <= FAST_PATH_MAX_S:
        out = pl.pallas_call(
            _single_tile_kernel,
            out_shape=jax.ShapeDtypeStruct((S, d_pad), jnp.float32),
        )(x_bf, wq, wk, wv)
        return out[:, :d_out]

    # ---- flash path ----
    t = seq_tile                       # multiple of 16 (bf16 packing) and of 128
    s_pad = _round_up(S, t)
    if s_pad != S:
        x_bf = jnp.pad(x_bf, ((0, s_pad - S), (0, 0)))
    n_t = s_pad // t                   # S > 256 and t = 256  =>  n_t >= 2 (megacore)

    # Pass 1: project Q/K/V once (not once per query tile).
    q, k, v = pl.pallas_call(
        _qkv_proj_kernel,
        out_shape=(jax.ShapeDtypeStruct((s_pad, d_pad), jnp.bfloat16),
                   jax.ShapeDtypeStruct((s_pad, d_pad), jnp.bfloat16),
                   jax.ShapeDtypeStruct((s_pad, d_pad), jnp.bfloat16)),
        grid_spec=pltpu.PrefetchScalarGridSpec(
            num_scalar_prefetch=0,
            grid=(n_t,),
            in_specs=[
                pl.BlockSpec((t, d_in), lambda i: (i, 0)),      # x tile
                pl.BlockSpec((d_in, d_pad), lambda i: (0, 0)),  # Wq (pre-scaled)
                pl.BlockSpec((d_in, d_pad), lambda i: (0, 0)),  # Wk
                pl.BlockSpec((d_in, d_pad), lambda i: (0, 0)),  # Wv
            ],
            out_specs=[
                pl.BlockSpec((t, d_pad), lambda i: (i, 0)),
                pl.BlockSpec((t, d_pad), lambda i: (i, 0)),
                pl.BlockSpec((t, d_pad), lambda i: (i, 0)),
            ],
        ),
        compiler_params=pltpu.CompilerParams(
            dimension_semantics=("parallel",),
            vmem_limit_bytes=VMEM_LIMIT_BYTES),
    )(x_bf, wq, wk, wv)

    # Pass 2: flash attention over the precomputed tiles.
    kernel = functools.partial(_flash_attn_kernel, S, t, s_pad != S)
    cost = pl.CostEstimate(
        flops=4 * s_pad * s_pad * d_pad,          # QK^T + PV
        transcendentals=s_pad * s_pad,            # exp
        bytes_accessed=3 * s_pad * d_pad * 2 + s_pad * d_pad * 4)

    out = pl.pallas_call(
        kernel,
        out_shape=jax.ShapeDtypeStruct((s_pad, d_pad), jnp.float32),
        grid_spec=pltpu.PrefetchScalarGridSpec(
            num_scalar_prefetch=0,
            grid=(n_t, n_t),                       # (query tiles, kv tiles) – reduction last
            in_specs=[
                pl.BlockSpec((t, d_pad), lambda qi, ki: (qi, 0)),   # Q tile
                pl.BlockSpec((t, d_pad), lambda qi, ki: (ki, 0)),   # K tile
                pl.BlockSpec((t, d_pad), lambda qi, ki: (ki, 0)),   # V tile
            ],
            out_specs=pl.BlockSpec((t, d_pad), lambda qi, ki: (qi, 0)),
            scratch_shapes=[
                pltpu.VMEM((t, 1), jnp.float32),       # running max
                pltpu.VMEM((t, 1), jnp.float32),       # running denom
                pltpu.VMEM((t, d_pad), jnp.float32),   # f32 output accumulator
            ],
        ),
        compiler_params=pltpu.CompilerParams(
            dimension_semantics=("parallel", "arbitrary"),
            vmem_limit_bytes=VMEM_LIMIT_BYTES),
        cost_estimate=cost,
    )(q, k, v)

    return out[:S, :d_out]


def _reference(x, w_q, w_k, w_v):
    q = x @ w_q
    k = x @ w_k
    v = x @ w_v
    s = q @ k.T / jnp.sqrt(jnp.float32(k.shape[-1]))
    return jax.nn.softmax(s, axis=-1) @ v


if __name__ == "__main__":
    key = jax.random.PRNGKey(0)
    kx, kq, kk, kv_key, kx2 = jax.random.split(key, 5)

    # Small shapes consistent with the module -> single-block fast path.
    S, d_in, d_out = 8, 16, 32
    x = jax.random.normal(kx, (S, d_in), dtype=jnp.float32)
    # Module stores weights as (d_in, d_out) (Linear weight transposed).
    w_q = jax.random.normal(kq, (d_in, d_out), dtype=jnp.float32) * 0.1
    w_k = jax.random.normal(kk, (d_in, d_out), dtype=jnp.float32) * 0.1
    w_v = jax.random.normal(kv_key, (d_in, d_out), dtype=jnp.float32) * 0.1

    out = jax.block_until_ready(self_attention_same_weight(x, w_q, w_k, w_v))
    ref = _reference(x, w_q, w_k, w_v)
    assert out.shape == (S, d_out)
    assert jnp.allclose(out, ref, atol=3e-2, rtol=3e-2), "fast-path mismatch"

    # Longer sequence -> tiled flash path (prologue projection + online softmax,
    # exercises sequence padding/masking and a 2x2 grid).
    S2 = 384
    x2 = jax.random.normal(kx2, (S2, d_in), dtype=jnp.float32)
    out2 = jax.block_until_ready(self_attention_same_weight(x2, w_q, w_k, w_v))
    ref2 = _reference(x2, w_q, w_k, w_v)
    assert out2.shape == (S2, d_out)
    assert jnp.allclose(out2, ref2, atol=3e-2, rtol=3e-2), "flash-path mismatch"

    print("KERNEL_OK")
</pallas_src>

<mosaic_0001>
module attributes {stable_mosaic.version = 11 : i64} {
  func.func @_single_tile_kernel(%arg0: memref<8x16xbf16, #tpu.memory_space<vmem>>, %arg1: memref<16x128xbf16, #tpu.memory_space<vmem>>, %arg2: memref<16x128xbf16, #tpu.memory_space<vmem>>, %arg3: memref<16x128xbf16, #tpu.memory_space<vmem>>, %arg4: memref<8x128xf32, #tpu.memory_space<vmem>>) attributes {dimension_semantics = [], scalar_prefetch = 0 : i64, scratch_operands = 0 : i64, tpu.core_type = #tpu.core_type<tc>} {
    %c0 = arith.constant 0 : index
    %c0_0 = arith.constant 0 : index
    %0 = vector.load %arg0[%c0, %c0_0] : memref<8x16xbf16, #tpu.memory_space<vmem>>, vector<8x16xbf16>
    %c0_1 = arith.constant 0 : index
    %c0_2 = arith.constant 0 : index
    %1 = vector.load %arg1[%c0_1, %c0_2] : memref<16x128xbf16, #tpu.memory_space<vmem>>, vector<16x128xbf16>
    %cst = arith.constant dense<0.000000e+00> : vector<8x128xf32>
    %2 = tpu.matmul %0, %1, %cst {dimension_numbers = #tpu.dot_dimension_numbers<[1], [0], [0], [1], [0, 0, 1, 1], [], []>} : vector<8x16xbf16>, vector<16x128xbf16>, vector<8x128xf32> -> vector<8x128xf32>
    %c0_3 = arith.constant 0 : index
    %c0_4 = arith.constant 0 : index
    %3 = vector.load %arg2[%c0_3, %c0_4] : memref<16x128xbf16, #tpu.memory_space<vmem>>, vector<16x128xbf16>
    %cst_5 = arith.constant dense<0.000000e+00> : vector<8x128xf32>
    %4 = tpu.matmul %0, %3, %cst_5 {dimension_numbers = #tpu.dot_dimension_numbers<[1], [0], [0], [1], [0, 0, 1, 1], [], []>} : vector<8x16xbf16>, vector<16x128xbf16>, vector<8x128xf32> -> vector<8x128xf32>
    %c0_6 = arith.constant 0 : index
    %c0_7 = arith.constant 0 : index
    %5 = vector.load %arg3[%c0_6, %c0_7] : memref<16x128xbf16, #tpu.memory_space<vmem>>, vector<16x128xbf16>
    %cst_8 = arith.constant dense<0.000000e+00> : vector<8x128xf32>
    %6 = tpu.matmul %0, %5, %cst_8 {dimension_numbers = #tpu.dot_dimension_numbers<[1], [0], [0], [1], [0, 0, 1, 1], [], []>} : vector<8x16xbf16>, vector<16x128xbf16>, vector<8x128xf32> -> vector<8x128xf32>
    %7 = arith.truncf %2 : vector<8x128xf32> to vector<8x128xbf16>
    %8 = arith.truncf %4 : vector<8x128xf32> to vector<8x128xbf16>
    %cst_9 = arith.constant dense<0.000000e+00> : vector<8x8xf32>
    %9 = tpu.matmul %7, %8, %cst_9 {dimension_numbers = #tpu.dot_dimension_numbers<[1], [1], [0], [0], [0, 0, 1, 0], [], []>} : vector<8x128xbf16>, vector<8x128xbf16>, vector<8x8xf32> -> vector<8x8xf32>
    %cst_10 = arith.constant dense<0xFF800000> : vector<8xf32>
    %10 = vector.multi_reduction <maximumf>, %9, %cst_10 [1] : vector<8x8xf32> to vector<8xf32>
    %11 = vector.shape_cast %10 : vector<8xf32> to vector<8x1xf32>
    %12 = vector.broadcast %11 : vector<8x1xf32> to vector<8x8xf32>
    %13 = arith.subf %9, %12 : vector<8x8xf32>
    %14 = math.exp %13 : vector<8x8xf32>
    %cst_11 = arith.constant dense<0.000000e+00> : vector<8xf32>
    %15 = vector.multi_reduction <add>, %14, %cst_11 [1] : vector<8x8xf32> to vector<8xf32>
    %16 = vector.shape_cast %15 : vector<8xf32> to vector<8x1xf32>
    %17 = tpu.reciprocal %16 {approx = true} : vector<8x1xf32> -> vector<8x1xf32>
    %18 = vector.broadcast %17 : vector<8x1xf32> to vector<8x8xf32>
    %19 = arith.mulf %14, %18 : vector<8x8xf32>
    %20 = arith.truncf %19 : vector<8x8xf32> to vector<8x8xbf16>
    %21 = arith.truncf %6 : vector<8x128xf32> to vector<8x128xbf16>
    %cst_12 = arith.constant dense<0.000000e+00> : vector<8x128xf32>
    %22 = tpu.matmul %20, %21, %cst_12 {dimension_numbers = #tpu.dot_dimension_numbers<[1], [0], [0], [1], [0, 0, 1, 1], [], []>} : vector<8x8xbf16>, vector<8x128xbf16>, vector<8x128xf32> -> vector<8x128xf32>
    %c0_13 = arith.constant 0 : index
    %c0_14 = arith.constant 0 : index
    %23 = vector.load %arg4[%c0_13, %c0_14] : memref<8x128xf32, #tpu.memory_space<vmem>>, vector<8x128xf32>
    tpu.vector_store %arg4[%c0_13, %c0_14], %22 {strides = array<i32>} : memref<8x128xf32, #tpu.memory_space<vmem>>, vector<8x128xf32>,
    return
  }
}

</mosaic_0001>

<llo_original>
// kernel: tpu_custom_call.1
$region0: #{tpu_custom_call.1}
  #allocation0 [shape = 'u32[]', space=smem, size = 0x4, offset = 0x4, fixed_abs, tag = 'smem constant byte address 0x4 - core index']
  #allocation1 [shape = 'u32[144,128]{1,0:T(1,128)}', space=vmem, size = 0x12000, scoped, tag = 'internal scratch']
  %s0 = inlined_call_operand.hbm [shape: bf16[8,16], index: 0, kind: input, shape index: {}]
  %s1 = inlined_call_operand.hbm [shape: bf16[16,128], index: 1, kind: input, shape index: {}]
  %s2 = inlined_call_operand.hbm [shape: bf16[16,128], index: 2, kind: input, shape index: {}]
  %s3 = inlined_call_operand.hbm [shape: bf16[16,128], index: 3, kind: input, shape index: {}]
  %s4 = inlined_call_operand.hbm [shape: f32[8,128], index: 4, kind: output, shape index: {}]
  %s5 = sld [smem:[#allocation0]]
  $region42: #{tpu_custom_call.1} parent=0
    _
  %s7 = ssub.s32 1, %s5
  %s8 = scalar_select 0, %s7, %s5
  $region1: #{tpu_custom_call.1} parent=0
    #allocation2 [shape = 'u8[2048]{0}', space=vmem, size = 0x800, scoped, tag = 'input window, operand 0, single buffered']
    #allocation3 [shape = 's32[1]{0}', space=sflag, size = 0x4, scoped, tag = 'scoped memory for tpu_custom_call.1']
    #allocation4 [shape = 's32[1]{0}', space=sflag, size = 0x4, scoped, tag = 'scoped memory for tpu_custom_call.1']
    #allocation5 [shape = 'u8[4096]{0}', space=vmem, size = 0x1000, scoped, tag = 'input window, operand 1, single buffered']
    #allocation6 [shape = 's32[1]{0}', space=sflag, size = 0x4, scoped, tag = 'scoped memory for tpu_custom_call.1']
    #allocation7 [shape = 'u8[4096]{0}', space=vmem, size = 0x1000, scoped, tag = 'input window, operand 2, single buffered']
    #allocation8 [shape = 'u8[4096]{0}', space=vmem, size = 0x1000, scoped, tag = 'input window, operand 3, single buffered']
    #allocation9 [shape = 's32[1]{0}', space=sflag, size = 0x4, scoped, tag = 'scoped memory for tpu_custom_call.1']
    #allocation10 [shape = 'u8[4096]{0}', space=vmem, size = 0x1000, scoped, tag = 'output window, operand 0, single buffered']
    %9 = vsyncpa [#allocation3], 0
    %10 = vsyncpa [#allocation6], 0
    %11 = vsyncpa [#allocation9], 0
    %12 = vsyncpa [#allocation4], 0
    // Predicated region
    $region2: #{tpu_custom_call.1} parent=1 // pred_check
      _
    $region3: #{tpu_custom_call.1} parent=1 // pred_check_branch
      %14 = sbr.rel (0) target = $region5
    $region4: #{tpu_custom_call.1} parent=1 // pred_region
      %s16 = ssub.s32 64, 64
      %17 = vsyncadd [#allocation3], %s16
      %s19 = sshll.u32 [#allocation2], 4
      %s20 = int_to_ptr.vmem [resolvable:$true] %s19
      %22 = dma.hbm_to_vmem [thread:$0]  %s0, 64, %s20, [#allocation3]
    $region5: #{tpu_custom_call.1} parent=1 // pred_fallthru
      _
    // Predicated region
    $region6: #{tpu_custom_call.1} parent=1 // pred_check
      _
    $region7: #{tpu_custom_call.1} parent=1 // pred_check_branch
      %24 = sbr.rel (0) target = $region9
    $region8: #{tpu_custom_call.1} parent=1 // pred_region
      %s26 = ssub.s32 128, 128
      %27 = vsyncadd [#allocation6], %s26
      %s28 = sshll.u32 [#allocation5], 4
      %s29 = int_to_ptr.vmem [resolvable:$true] %s28
      %34 = dma.hbm_to_vmem [thread:$0]  %s1, 128, %s29, [#allocation6], 64, 64, 4
    $region9: #{tpu_custom_call.1} parent=1 // pred_fallthru
      _
    // Predicated region
    $region10: #{tpu_custom_call.1} parent=1 // pred_check
      _
    $region11: #{tpu_custom_call.1} parent=1 // pred_check_branch
      %36 = sbr.rel (0) target = $region13
    $region12: #{tpu_custom_call.1} parent=1 // pred_region
      %s38 = ssub.s32 128, 128
      %39 = vsyncadd [#allocation6], %s38
      %s40 = sshll.u32 [#allocation7], 4
      %s41 = int_to_ptr.vmem [resolvable:$true] %s40
      %46 = dma.hbm_to_vmem [thread:$0]  %s2, 128, %s41, [#allocation6], 64, 64, 4
    $region13: #{tpu_custom_call.1} parent=1 // pred_fallthru
      _
    // Predicated region
    $region14: #{tpu_custom_call.1} parent=1 // pred_check
      _
    $region15: #{tpu_custom_call.1} parent=1 // pred_check_branch
      %48 = sbr.rel (0) target = $region17
    $region16: #{tpu_custom_call.1} parent=1 // pred_region
      %s50 = ssub.s32 128, 128
      %51 = vsyncadd [#allocation9], %s50
      %s52 = sshll.u32 [#allocation8], 4
      %s53 = int_to_ptr.vmem [resolvable:$true] %s52
      %58 = dma.hbm_to_vmem [thread:$0]  %s3, 128, %s53, [#allocation9], 64, 64, 4
    $region17: #{tpu_custom_call.1} parent=1 // pred_fallthru
      _
    // Predicated region
    $region18: #{tpu_custom_call.1} parent=1 // pred_check
      _
    $region19: #{tpu_custom_call.1} parent=1 // pred_check_branch
      %60 = sbr.rel (0) target = $region21
    $region20: #{tpu_custom_call.1} parent=1 // pred_region
      %61 = dma.done [#allocation3], 64
    $region21: #{tpu_custom_call.1} parent=1 // pred_fallthru
      _
    // Predicated region
    $region22: #{tpu_custom_call.1} parent=1 // pred_check
      _
    $region23: #{tpu_custom_call.1} parent=1 // pred_check_branch
      %63 = sbr.rel (0) target = $region25
    $region24: #{tpu_custom_call.1} parent=1 // pred_region
      %64 = dma.done [#allocation6], 128
    $region25: #{tpu_custom_call.1} parent=1 // pred_fallthru
      _
    // Predicated region
    $region26: #{tpu_custom_call.1} parent=1 // pred_check
      _
    $region27: #{tpu_custom_call.1} parent=1 // pred_check_branch
      %66 = sbr.rel (0) target = $region29
    $region28: #{tpu_custom_call.1} parent=1 // pred_region
      %67 = dma.done [#allocation6], 128
    $region29: #{tpu_custom_call.1} parent=1 // pred_fallthru
      _
    // Predicated region
    $region30: #{tpu_custom_call.1} parent=1 // pred_check
      _
    $region31: #{tpu_custom_call.1} parent=1 // pred_check_branch
      %69 = sbr.rel (0) target = $region33
    $region32: #{tpu_custom_call.1} parent=1 // pred_region
      %70 = dma.done [#allocation9], 128
    $region33: #{tpu_custom_call.1} parent=1 // pred_fallthru
      _
    %v72 = vld [vmem:[#allocation2] sm:$0xf]
    %v73 = vld [vmem:[#allocation5] sm:$0xf]
    %v74 = vld [vmem:[#allocation5 + $0x4] sm:$0xf]
    %v77 = vunpack.c.l.b16 %v73
    %v78 = vunpack.c.l.b16 %v74
    %v79 = vpack.c.b16 %v78, %v77
    %vm81 = vcmask 130048
    %v83 = vsel %vm81, %v72, 0
    %85 = vmatprep.subr.bf16.mxu0 0
    %86 = vmatpush1.bf16.msra.mxu0 0
    %87 = vmatprep.subr.bf16.mxu0 0
    %88 = vmatpush1.bf16.msra.mxu0 0
    %89 = vmatprep.subr.bf16.mxu0 0
    %90 = vmatpush1.bf16.msra.mxu0 0
    %91 = vmatprep.subr.bf16.mxu0 0
    %92 = vmatpush1.bf16.msra.mxu0 0
    %93 = vmatprep.subr.bf16.mxu0 0
    %94 = vmatpush1.bf16.msra.mxu0 0
    %95 = vmatprep.subr.bf16.mxu0 0
    %96 = vmatpush1.bf16.msra.mxu0 0
    %97 = vmatprep.subr.bf16.mxu0 0
    %98 = vmatpush1.bf16.msra.mxu0 0
    %99 = vmatprep.subr.bf16.mxu0 0
    %100 = vmatpush1.bf16.msra.mxu0 %v79
    %101 = vmatprep.subr.bf16.mxu0 0
    %102 = vmatpush2.bf16.msra.mxu0 0
    %103 = vmatprep.subr.bf16.mxu0 0
    %104 = vmatpush2.bf16.msra.mxu0 0
    %105 = vmatprep.subr.bf16.mxu0 0
    %106 = vmatpush2.bf16.msra.mxu0 0
    %107 = vmatprep.subr.bf16.mxu0 0
    %108 = vmatpush2.bf16.msra.mxu0 0
    %109 = vmatprep.subr.bf16.mxu0 0
    %110 = vmatpush2.bf16.msra.mxu0 0
    %111 = vmatprep.subr.bf16.mxu0 0
    %112 = vmatpush2.bf16.msra.mxu0 0
    %113 = vmatprep.subr.bf16.mxu0 0
    %114 = vmatpush2.bf16.msra.mxu0 0
    %115 = vmatprep.subr.bf16.mxu0 0
    %116 = vmatpush2.bf16.msra.mxu0 0
    %117 = vmatprep.mubr.bf16.mxu0 0
    %118 = vmatmul.mubr.bf16.gmra.mxu0 %v83
    %v119 = vpop.f32.mrf.mxu0
    %v120 = vadd.f32 0.0, %v119
    %v121 = vpop.f32.mrf.mxu0
    %v122 = vpop.f32.mrf.mxu0
    %v123 = vpop.f32.mrf.mxu0
    %124 = vdwg.mxu0
    %v125 = vld [vmem:[#allocation7] sm:$0xf]
    %v126 = vld [vmem:[#allocation7 + $0x4] sm:$0xf]
    %v129 = vunpack.c.l.b16 %v125
    %v130 = vunpack.c.l.b16 %v126
    %v131 = vpack.c.b16 %v130, %v129
    %133 = vmatprep.subr.bf16.mxu0 0
    %134 = vmatpush1.bf16.msra.mxu0 0
    %135 = vmatprep.subr.bf16.mxu0 0
    %136 = vmatpush1.bf16.msra.mxu0 0
    %137 = vmatprep.subr.bf16.mxu0 0
    %138 = vmatpush1.bf16.msra.mxu0 0
    %139 = vmatprep.subr.bf16.mxu0 0
    %140 = vmatpush1.bf16.msra.mxu0 0
    %141 = vmatprep.subr.bf16.mxu0 0
    %142 = vmatpush1.bf16.msra.mxu0 0
    %143 = vmatprep.subr.bf16.mxu0 0
    %144 = vmatpush1.bf16.msra.mxu0 0
    %145 = vmatprep.subr.bf16.mxu0 0
    %146 = vmatpush1.bf16.msra.mxu0 0
    %147 = vmatprep.subr.bf16.mxu0 0
    %148 = vmatpush1.bf16.msra.mxu0 %v131
    %149 = vmatprep.subr.bf16.mxu0 0
    %150 = vmatpush2.bf16.msra.mxu0 0
    %151 = vmatprep.subr.bf16.mxu0 0
    %152 = vmatpush2.bf16.msra.mxu0 0
    %153 = vmatprep.subr.bf16.mxu0 0
    %154 = vmatpush2.bf16.msra.mxu0 0
    %155 = vmatprep.subr.bf16.mxu0 0
    %156 = vmatpush2.bf16.msra.mxu0 0
    %157 = vmatprep.subr.bf16.mxu0 0
    %158 = vmatpush2.bf16.msra.mxu0 0
    %159 = vmatprep.subr.bf16.mxu0 0
    %160 = vmatpush2.bf16.msra.mxu0 0
    %161 = vmatprep.subr.bf16.mxu0 0
    %162 = vmatpush2.bf16.msra.mxu0 0
    %163 = vmatprep.subr.bf16.mxu0 0
    %164 = vmatpush2.bf16.msra.mxu0 0
    %165 = vmatprep.mubr.bf16.mxu0 0
    %166 = vmatmul.mubr.bf16.gmra.mxu0 %v83
    %v167 = vpop.f32.mrf.mxu0
    %v168 = vadd.f32 0.0, %v167
    %v169 = vpop.f32.mrf.mxu0
    %v170 = vpop.f32.mrf.mxu0
    %v171 = vpop.f32.mrf.mxu0
    %172 = vdwg.mxu0
    %v173 = vld [vmem:[#allocation8] sm:$0xf]
    %v174 = vld [vmem:[#allocation8 + $0x4] sm:$0xf]
    %v177 = vunpack.c.l.b16 %v173
    %v178 = vunpack.c.l.b16 %v174
    %v179 = vpack.c.b16 %v178, %v177
    %181 = vmatprep.subr.bf16.mxu0 0
    %182 = vmatpush1.bf16.msra.mxu0 0
    %183 = vmatprep.subr.bf16.mxu0 0
    %184 = vmatpush1.bf16.msra.mxu0 0
    %185 = vmatprep.subr.bf16.mxu0 0
    %186 = vmatpush1.bf16.msra.mxu0 0
    %187 = vmatprep.subr.bf16.mxu0 0
    %188 = vmatpush1.bf16.msra.mxu0 0
    %189 = vmatprep.subr.bf16.mxu0 0
    %190 = vmatpush1.bf16.msra.mxu0 0
    %191 = vmatprep.subr.bf16.mxu0 0
    %192 = vmatpush1.bf16.msra.mxu0 0
    %193 = vmatprep.subr.bf16.mxu0 0
    %194 = vmatpush1.bf16.msra.mxu0 0
    %195 = vmatprep.subr.bf16.mxu0 0
    %196 = vmatpush1.bf16.msra.mxu0 %v179
    %197 = vmatprep.subr.bf16.mxu0 0
    %198 = vmatpush2.bf16.msra.mxu0 0
    %199 = vmatprep.subr.bf16.mxu0 0
    %200 = vmatpush2.bf16.msra.mxu0 0
    %201 = vmatprep.subr.bf16.mxu0 0
    %202 = vmatpush2.bf16.msra.mxu0 0
    %203 = vmatprep.subr.bf16.mxu0 0
    %204 = vmatpush2.bf16.msra.mxu0 0
    %205 = vmatprep.subr.bf16.mxu0 0
    %206 = vmatpush2.bf16.msra.mxu0 0
    %207 = vmatprep.subr.bf16.mxu0 0
    %208 = vmatpush2.bf16.msra.mxu0 0
    %209 = vmatprep.subr.bf16.mxu0 0
    %210 = vmatpush2.bf16.msra.mxu0 0
    %211 = vmatprep.subr.bf16.mxu0 0
    %212 = vmatpush2.bf16.msra.mxu0 0
    %213 = vmatprep.mubr.bf16.mxu0 0
    %214 = vmatmul.mubr.bf16.gmra.mxu0 %v83
    %v215 = vpop.f32.mrf.mxu0
    %v216 = vadd.f32 0.0, %v215
    %v217 = vpop.f32.mrf.mxu0
    %v218 = vpop.f32.mrf.mxu0
    %v219 = vpop.f32.mrf.mxu0
    %220 = vdwg.mxu0
    %v221 = vpack.c.bf16 %v120, %v120
    %v222 = vpack.c.bf16 %v168, %v168
    %223 = vmatprep.subr.bf16.mxu0 0
    %224 = vmatpush1.bf16.xpose.msra.mxu0 0
    %225 = vmatprep.subr.bf16.mxu0 0
    %226 = vmatpush1.bf16.xpose.msra.mxu0 0
    %227 = vmatprep.subr.bf16.mxu0 0
    %228 = vmatpush1.bf16.xpose.msra.mxu0 0
    %229 = vmatprep.subr.bf16.mxu0 0
    %230 = vmatpush1.bf16.xpose.msra.mxu0 0
    %231 = vmatprep.subr.bf16.mxu0 0
    %232 = vmatpush1.bf16.xpose.msra.mxu0 0
    %233 = vmatprep.subr.bf16.mxu0 0
    %234 = vmatpush1.bf16.xpose.msra.mxu0 0
    %235 = vmatprep.subr.bf16.mxu0 0
    %236 = vmatpush1.bf16.xpose.msra.mxu0 0
    %237 = vmatprep.subr.bf16.mxu0 0
    %238 = vmatpush1.bf16.xpose.msra.mxu0 %v222
    %239 = vmatprep.subr.bf16.mxu0 0
    %240 = vmatpush2.bf16.xpose.msra.mxu0 0
    %241 = vmatprep.subr.bf16.mxu0 0
    %242 = vmatpush2.bf16.xpose.msra.mxu0 0
    %243 = vmatprep.subr.bf16.mxu0 0
    %244 = vmatpush2.bf16.xpose.msra.mxu0 0
    %245 = vmatprep.subr.bf16.mxu0 0
    %246 = vmatpush2.bf16.xpose.msra.mxu0 0
    %247 = vmatprep.subr.bf16.mxu0 0
    %248 = vmatpush2.bf16.xpose.msra.mxu0 0
    %249 = vmatprep.subr.bf16.mxu0 0
    %250 = vmatpush2.bf16.xpose.msra.mxu0 0
    %251 = vmatprep.subr.bf16.mxu0 0
    %252 = vmatpush2.bf16.xpose.msra.mxu0 0
    %253 = vmatprep.subr.bf16.mxu0 0
    %254 = vmatpush2.bf16.xpose.msra.mxu0 0
    %255 = vmatprep.mubr.bf16.mxu0 0
    %256 = vmatmul.mubr.bf16.gmra.mxu0 %v221
    %v257 = vpop.f32.mrf.mxu0
    %v258 = vadd.f32 0.0, %v257
    %v259 = vpop.f32.mrf.mxu0
    %v260 = vpop.f32.mrf.mxu0
    %v261 = vpop.f32.mrf.mxu0
    %262 = vdwg.mxu0
    %vm263 = vcmask 64512
    %v264 = vsel %vm263, %v258, -inf
    %265 = vmax.xlane.f32.xlu0 %v264
    %v266 = vpop.xlane.xlu0 %265
    %v267 = vsub.f32 %v258, %v266
    %v268 = vmul.f32 %v267, 1.442695
    %v269 = vpow.pop %v268
    %v270 = vsel %vm263, %v269, 0.0
    %271 = vadd.xlane.f32.xlu0 %v270
    %v272 = vpop.xlane.xlu0 %271
    %v273 = vrcp.pop %v272
    %v274 = vmul.f32 %v269, %v273
    %v275 = vpack.c.bf16 %v274, %v274
    %v276 = vpack.c.bf16 %v216, %v216
    %v278 = vsel %vm263, %v275, 0
    %vm280 = vcmask 1043456
    %v282 = vsel %vm280, %v276, 0
    %284 = vmatprep.subr.bf16.mxu0 0
    %285 = vmatpush1.bf16.msra.mxu0 0
    %286 = vmatprep.subr.bf16.mxu0 0
    %287 = vmatpush1.bf16.msra.mxu0 0
    %288 = vmatprep.subr.bf16.mxu0 0
    %289 = vmatpush1.bf16.msra.mxu0 0
    %290 = vmatprep.subr.bf16.mxu0 0
    %291 = vmatpush1.bf16.msra.mxu0 0
    %292 = vmatprep.subr.bf16.mxu0 0
    %293 = vmatpush1.bf16.msra.mxu0 0
    %294 = vmatprep.subr.bf16.mxu0 0
    %295 = vmatpush1.bf16.msra.mxu0 0
    %296 = vmatprep.subr.bf16.mxu0 0
    %297 = vmatpush1.bf16.msra.mxu0 0
    %298 = vmatprep.subr.bf16.mxu0 0
    %299 = vmatpush1.bf16.msra.mxu0 %v282
    %300 = vmatprep.subr.bf16.mxu0 0
    %301 = vmatpush2.bf16.msra.mxu0 0
    %302 = vmatprep.subr.bf16.mxu0 0
    %303 = vmatpush2.bf16.msra.mxu0 0
    %304 = vmatprep.subr.bf16.mxu0 0
    %305 = vmatpush2.bf16.msra.mxu0 0
    %306 = vmatprep.subr.bf16.mxu0 0
    %307 = vmatpush2.bf16.msra.mxu0 0
    %308 = vmatprep.subr.bf16.mxu0 0
    %309 = vmatpush2.bf16.msra.mxu0 0
    %310 = vmatprep.subr.bf16.mxu0 0
    %311 = vmatpush2.bf16.msra.mxu0 0
    %312 = vmatprep.subr.bf16.mxu0 0
    %313 = vmatpush2.bf16.msra.mxu0 0
    %314 = vmatprep.subr.bf16.mxu0 0
    %315 = vmatpush2.bf16.msra.mxu0 0
    %316 = vmatprep.mubr.bf16.mxu0 0
    %317 = vmatmul.mubr.bf16.gmra.mxu0 %v278
    %v318 = vpop.f32.mrf.mxu0
    %v319 = vadd.f32 0.0, %v318
    %v320 = vpop.f32.mrf.mxu0
    %v321 = vpop.f32.mrf.mxu0
    %v322 = vpop.f32.mrf.mxu0
    %323 = vdwg.mxu0
    %324 = vst [vmem:[#allocation10] sm:$0xff] %v319
    // Predicated region
    $region34: #{tpu_custom_call.1} parent=1 // pred_check
      _
    $region35: #{tpu_custom_call.1} parent=1 // pred_check_branch
      %326 = sbr.rel (0) target = $region37
    $region36: #{tpu_custom_call.1} parent=1 // pred_region
      %s328 = ssub.s32 128, 128
      %329 = vsyncadd [#allocation4], %s328
      %s331 = sshll.u32 [#allocation10], 4
      %s332 = int_to_ptr.vmem [resolvable:$true] %s331
      %334 = dma.vmem_to_hbm [thread:$0]  %s332, 128, %s4, [#allocation4]
    $region37: #{tpu_custom_call.1} parent=1 // pred_fallthru
      _
    // Predicated region
    $region38: #{tpu_custom_call.1} parent=1 // pred_check
      _
    $region39: #{tpu_custom_call.1} parent=1 // pred_check_branch
      %336 = sbr.rel (0) target = $region41
    $region40: #{tpu_custom_call.1} parent=1 // pred_region
      %337 = dma.done [#allocation4], 128
    $region41: #{tpu_custom_call.1} parent=1 // pred_fallthru
      _
    %338 = vsyncpa [#allocation3], 1
    %339 = vsyncpa [#allocation6], 1
    %340 = vsyncpa [#allocation9], 1
    %341 = vsyncpa [#allocation4], 1

</llo_original>
